<compile_context>
chip_gen: v7x
topology: tpu7x:2x2x1
jax: 0.10.0
libtpu: 0.0.40
codegen_flags: <defaults>
</compile_context>

<pallas_src>
import math

import jax
import jax.numpy as jnp
from jax.experimental import pallas as pl
from jax.experimental.pallas import tpu as pltpu


def _round_up(x: int, m: int) -> int:
    return ((x + m - 1) // m) * m


def _matmul_bias_kernel(x_ref, w_ref, b_ref, o_ref, acc_ref):
    """One (tm, tn) output tile, reduced over the K grid axis (axis 2)."""
    k = pl.program_id(2)

    @pl.when(k == 0)
    def _():
        acc_ref[...] = jnp.zeros_like(acc_ref)

    acc_ref[...] += jnp.dot(
        x_ref[...], w_ref[...], preferred_element_type=jnp.float32
    )

    @pl.when(k == pl.num_programs(2) - 1)
    def _():
        # Bias added once per output tile, in f32, then cast to the output dtype.
        o_ref[...] = (acc_ref[...] + b_ref[...]).astype(o_ref.dtype)


def pallas_linear(x2d: jax.Array, w: jax.Array, b: jax.Array,
                  *, tm_max: int = 256, tn_max: int = 256, tk_max: int = 512
                  ) -> jax.Array:
    """y[M, N] = x2d[M, K] @ w[K, N] + b[N], tiled over an (M, N, K) grid."""
    M, K = x2d.shape
    K2, N = w.shape
    assert K == K2, (K, K2)
    out_dtype = x2d.dtype  # matches original behavior; compute is f32 on the MXU.

    # Tile sizes: clamp to problem size, keep lane dims 128-multiples and the
    # sublane dim an 8-multiple so loads/stores are unmasked.
    tm = min(tm_max, _round_up(M, 8))
    tk = min(tk_max, _round_up(K, 128))
    tn = min(tn_max, _round_up(N, 128))

    Mp = _round_up(M, tm)
    Kp = _round_up(K, tk)
    Np = _round_up(N, tn)

    # Zero-pad to tile multiples: zero K rows/cols contribute nothing; padded
    # M rows / N cols are sliced away after the kernel.
    if (Mp, Kp) != (M, K):
        x2d = jnp.pad(x2d, ((0, Mp - M), (0, Kp - K)))
    if (Kp, Np) != (K, N):
        w = jnp.pad(w, ((0, Kp - K), (0, Np - N)))
    b2d = b.reshape(1, N)
    if Np != N:
        b2d = jnp.pad(b2d, ((0, 0), (0, Np - N)))

    grid = (Mp // tm, Np // tn, Kp // tk)

    # Advisory cost estimate + VMEM budget (2x double-buffered inputs + bias,
    # output double buffer + accumulator), with headroom, capped at 64 MiB (v7x).
    flops = 2 * Mp * Np * Kp
    bytes_accessed = 4 * (Mp * Kp + Kp * Np + Mp * Np + Np)
    vmem_bytes = 2 * (tm * tk + tk * tn + tn) * 4 + 3 * tm * tn * 4
    vmem_bytes = min(max(2 * vmem_bytes, 8 << 20), 64 << 20)

    out_padded = pl.pallas_call(
        _matmul_bias_kernel,
        out_shape=jax.ShapeDtypeStruct((Mp, Np), out_dtype),
        grid_spec=pltpu.PrefetchScalarGridSpec(
            num_scalar_prefetch=0,
            grid=grid,
            in_specs=[
                pl.BlockSpec((tm, tk), lambda i, j, k: (i, k)),   # x tile
                pl.BlockSpec((tk, tn), lambda i, j, k: (k, j)),   # w tile
                pl.BlockSpec((1, tn), lambda i, j, k: (0, j)),    # bias tile
            ],
            out_specs=pl.BlockSpec((tm, tn), lambda i, j, k: (i, j)),
            scratch_shapes=[pltpu.VMEM((tm, tn), jnp.float32)],
        ),
        compiler_params=pltpu.CompilerParams(
            dimension_semantics=("parallel", "parallel", "arbitrary"),
            vmem_limit_bytes=vmem_bytes,
        ),
        cost_estimate=pl.CostEstimate(
            flops=flops, transcendentals=0, bytes_accessed=bytes_accessed
        ),
    )(x2d, w, b2d)

    if (Mp, Np) != (M, N):
        out_padded = out_padded[:M, :N]
    return out_padded


class ReshapingLayer:
    """JAX/Pallas port of prescyent's ReshapingLayer."""

    def __init__(self, input_shapes, output_shapes, key):
        self.input_shapes = tuple(input_shapes)
        self.output_shapes = tuple(output_shapes)
        self.kept_dimensions = [
            i for i, s in enumerate(self.input_shapes) if self.output_shapes[i] == s
        ]
        self.identity = len(self.kept_dimensions) == len(self.input_shapes)
        if self.identity:
            return

        # Compose the torch.transpose swap sequence into a single permutation.
        ndim = len(self.input_shapes)
        perm = list(range(ndim))
        for i, dim in enumerate(self.kept_dimensions):
            perm[i], perm[dim] = perm[dim], perm[i]
        self.perm = tuple(perm)
        self.needs_transpose = self.perm != tuple(range(ndim))

        self.in_features = 1
        self.out_features = 1
        for dim in [
            i for i in range(len(self.input_shapes)) if i not in self.kept_dimensions
        ]:
            self.in_features *= self.input_shapes[dim]
            self.out_features *= self.output_shapes[dim]

        # Deterministic init mimicking torch.nn.Linear: U(-1/sqrt(in), 1/sqrt(in)).
        kw, kb = jax.random.split(key)
        bound = 1.0 / math.sqrt(self.in_features)
        # Stored as (in_features, out_features) so the kernel does x @ W directly.
        self.weight = jax.random.uniform(
            kw, (self.in_features, self.out_features), jnp.float32, -bound, bound
        )
        self.bias = jax.random.uniform(
            kb, (self.out_features,), jnp.float32, -bound, bound
        )

    def __call__(self, x: jax.Array) -> jax.Array:
        if self.identity:
            return x
        # Single fused permutation (skipped when it is the identity) instead of
        # a chain of swapaxes -> at most one extra HBM pass, often none.
        if self.needs_transpose:
            x = jnp.transpose(x, self.perm)
        # torch.flatten(input, n_kept) then collapse kept dims into matmul rows.
        x2d = x.reshape(-1, self.in_features)
        # TODO(synk): for toy sizes (like the demo below) a plain XLA `x2d @ W + b`
        # beats any custom-call launch; kept on the Pallas path here so the kernel
        # is exercised.
        y2d = pallas_linear(x2d, self.weight, self.bias)
        return y2d.reshape(self.output_shapes)


def _reference(layer: ReshapingLayer, x: jax.Array) -> jax.Array:
    """Pure-JAX reference of the same math (mirrors the PyTorch forward)."""
    if layer.identity:
        return x
    xr = x
    for i, dim in enumerate(layer.kept_dimensions):
        xr = jnp.swapaxes(xr, dim, i)
    xr2d = xr.reshape(-1, layer.in_features)
    y2d = jnp.dot(xr2d, layer.weight, preferred_element_type=jnp.float32)
    y2d = (y2d + layer.bias).astype(x.dtype)
    return y2d.reshape(layer.output_shapes)


if __name__ == "__main__":
    key = jax.random.PRNGKey(0)

    # Case 1: the canonical example. Input (2, 4, 16, 16) -> output (2, 8, 16, 32).
    # Kept dims: 0 and 2. in_features = 4*16 = 64, out_features = 8*32 = 256.
    # M = 32, K = 64 (padded to 128 in-kernel), N = 256; single-tile grid.
    in_shapes1, out_shapes1 = (2, 4, 16, 16), (2, 8, 16, 32)
    k_p1, k_x1, k_p2, k_x2 = jax.random.split(key, 4)
    layer1 = ReshapingLayer(in_shapes1, out_shapes1, k_p1)
    x1 = jax.random.normal(k_x1, in_shapes1, jnp.float32)
    y1 = jax.block_until_ready(layer1(x1))
    assert y1.shape == out_shapes1, (y1.shape, out_shapes1)
    y1_ref = _reference(layer1, x1)
    assert jnp.allclose(y1, y1_ref, atol=1e-4, rtol=1e-4)

    # Case 2: exercises a multi-tile grid + K/N padding.
    # Input (2, 32, 16, 24) -> output (2, 40, 16, 48); kept dims 0 and 2.
    # K = 768 (padded to 1024), N = 1920 (padded to 2048), grid = (1, 8, 2).
    in_shapes2, out_shapes2 = (2, 32, 16, 24), (2, 40, 16, 48)
    layer2 = ReshapingLayer(in_shapes2, out_shapes2, k_p2)
    x2 = jax.random.normal(k_x2, in_shapes2, jnp.float32)
    y2 = jax.block_until_ready(layer2(x2))
    assert y2.shape == out_shapes2, (y2.shape, out_shapes2)
    y2_ref = _reference(layer2, x2)
    assert jnp.allclose(y2, y2_ref, atol=1e-4, rtol=1e-4)

    print("KERNEL_OK")
</pallas_src>

<mosaic_0001>
module attributes {stable_mosaic.version = 11 : i64} {
  func.func @_matmul_bias_kernel(%arg0: i32, %arg1: i32, %arg2: i32, %arg3: memref<32x128xf32, #tpu.memory_space<vmem>>, %arg4: memref<128x256xf32, #tpu.memory_space<vmem>>, %arg5: memref<1x256xf32, #tpu.memory_space<vmem>>, %arg6: memref<32x256xf32, #tpu.memory_space<vmem>>, %arg7: memref<32x256xf32, #tpu.memory_space<vmem>>) attributes {dimension_semantics = [#tpu.dimension_semantics<parallel>, #tpu.dimension_semantics<parallel>, #tpu.dimension_semantics<arbitrary>], iteration_bounds = array<i64: 1, 1, 1>, scalar_prefetch = 0 : i64, scratch_operands = 1 : i64, tpu.core_type = #tpu.core_type<tc>, window_params = [{transform_indices = @transform_0, window_bounds = array<i64: 32, 128>}, {transform_indices = @transform_1, window_bounds = array<i64: 128, 256>}, {transform_indices = @transform_2, window_bounds = array<i64: 1, 256>}, {transform_indices = @transform_3, window_bounds = array<i64: 32, 256>}]} {
    %c0_i32 = arith.constant 0 : i32
    %0 = arith.cmpi eq, %arg2, %c0_i32 : i32
    %1 = arith.extui %0 : i1 to i32
    %c0_i32_0 = arith.constant 0 : i32
    %2 = arith.cmpi ne, %1, %c0_i32_0 : i32
    scf.if %2 {
      %cst_10 = arith.constant 0.000000e+00 : f32
      %12 = vector.broadcast %cst_10 : f32 to vector<32x256xf32>
      %c0_11 = arith.constant 0 : index
      %c0_12 = arith.constant 0 : index
      %13 = vector.load %arg7[%c0_11, %c0_12] : memref<32x256xf32, #tpu.memory_space<vmem>>, vector<32x256xf32>
      tpu.vector_store %arg7[%c0_11, %c0_12], %12 {strides = array<i32>} : memref<32x256xf32, #tpu.memory_space<vmem>>, vector<32x256xf32>,
    } else {
    }
    %c0 = arith.constant 0 : index
    %c0_1 = arith.constant 0 : index
    %3 = vector.load %arg7[%c0, %c0_1] : memref<32x256xf32, #tpu.memory_space<vmem>>, vector<32x256xf32>
    %c0_2 = arith.constant 0 : index
    %c0_3 = arith.constant 0 : index
    %4 = vector.load %arg3[%c0_2, %c0_3] : memref<32x128xf32, #tpu.memory_space<vmem>>, vector<32x128xf32>
    %c0_4 = arith.constant 0 : index
    %c0_5 = arith.constant 0 : index
    %5 = vector.load %arg4[%c0_4, %c0_5] : memref<128x256xf32, #tpu.memory_space<vmem>>, vector<128x256xf32>
    %cst = arith.constant dense<0.000000e+00> : vector<32x256xf32>
    %6 = tpu.matmul %4, %5, %cst {dimension_numbers = #tpu.dot_dimension_numbers<[1], [0], [0], [1], [0, 0, 1, 1], [], []>} : vector<32x128xf32>, vector<128x256xf32>, vector<32x256xf32> -> vector<32x256xf32>
    %7 = arith.addf %3, %6 : vector<32x256xf32>
    %c0_6 = arith.constant 0 : index
    %c0_7 = arith.constant 0 : index
    %8 = vector.load %arg7[%c0_6, %c0_7] : memref<32x256xf32, #tpu.memory_space<vmem>>, vector<32x256xf32>
    tpu.vector_store %arg7[%c0_6, %c0_7], %7 {strides = array<i32>} : memref<32x256xf32, #tpu.memory_space<vmem>>, vector<32x256xf32>,
    %c0_i32_8 = arith.constant 0 : i32
    %9 = arith.cmpi eq, %arg2, %c0_i32_8 : i32
    %10 = arith.extui %9 : i1 to i32
    %c0_i32_9 = arith.constant 0 : i32
    %11 = arith.cmpi ne, %10, %c0_i32_9 : i32
    scf.if %11 {
      %c0_10 = arith.constant 0 : index
      %c0_11 = arith.constant 0 : index
      %12 = vector.load %arg7[%c0_10, %c0_11] : memref<32x256xf32, #tpu.memory_space<vmem>>, vector<32x256xf32>
      %c0_12 = arith.constant 0 : index
      %c0_13 = arith.constant 0 : index
      %13 = vector.load %arg5[%c0_12, %c0_13] : memref<1x256xf32, #tpu.memory_space<vmem>>, vector<1x256xf32>
      %14 = vector.broadcast %13 : vector<1x256xf32> to vector<32x256xf32>
      %15 = arith.addf %12, %14 : vector<32x256xf32>
      %c0_14 = arith.constant 0 : index
      %c0_15 = arith.constant 0 : index
      %16 = vector.load %arg6[%c0_14, %c0_15] : memref<32x256xf32, #tpu.memory_space<vmem>>, vector<32x256xf32>
      tpu.vector_store %arg6[%c0_14, %c0_15], %15 {strides = array<i32>} : memref<32x256xf32, #tpu.memory_space<vmem>>, vector<32x256xf32>,
    } else {
    }
    return
  }
  func.func @transform_0(%arg0: i32, %arg1: i32, %arg2: i32) -> (i32, i32) {
    %c0_i32 = arith.constant 0 : i32
    return %arg0, %arg2 : i32, i32
  }
  func.func @transform_1(%arg0: i32, %arg1: i32, %arg2: i32) -> (i32, i32) {
    %c0_i32 = arith.constant 0 : i32
    return %arg2, %arg1 : i32, i32
  }
  func.func @transform_2(%arg0: i32, %arg1: i32, %arg2: i32) -> (i32, i32) {
    %c0_i32 = arith.constant 0 : i32
    %c0_i32_0 = arith.constant 0 : i32
    return %c0_i32, %arg1 : i32, i32
  }
  func.func @transform_3(%arg0: i32, %arg1: i32, %arg2: i32) -> (i32, i32) {
    %c0_i32 = arith.constant 0 : i32
    return %arg0, %arg1 : i32, i32
  }
}

</mosaic_0001>

<llo_original>
// kernel: tpu_custom_call.1
$region0: #{tpu_custom_call.1}
  #allocation0 [shape = 'u32[]', space=smem, size = 0x4, offset = 0x4, fixed_abs, tag = 'smem constant byte address 0x4 - core index']
  #allocation1 [shape = 'u32[144,128]{1,0:T(1,128)}', space=vmem, size = 0x12000, scoped, tag = 'internal scratch']
  #allocation2 [shape = 'f32[32,256]{1,0:T(8,128)}', space=vmem, size = 0x8000, scoped, tag = 'scratch operand']
  %s0 = inlined_call_operand.hbm [shape: f32[32,128], index: 0, kind: input, shape index: {}]
  %s1 = inlined_call_operand.hbm [shape: f32[128,256], index: 1, kind: input, shape index: {}]
  %s2 = inlined_call_operand.vmem [shape: f32[1,256], index: 2, kind: input, shape index: {}]
  %s3 = inlined_call_operand.hbm [shape: f32[32,256], index: 3, kind: output, shape index: {}]
  %s4 = sld [smem:[#allocation0]]
  $region38: #{tpu_custom_call.1} parent=0
    _
  %s6 = ssub.s32 1, %s4
  %s7 = scalar_select 0, %s6, %s4
  $region1: #{tpu_custom_call.1} parent=0
    #allocation3 [shape = 'u8[16384]{0}', space=vmem, size = 0x4000, scoped, tag = 'input window, operand 0, single buffered']
    #allocation4 [shape = 's32[1]{0}', space=sflag, size = 0x4, scoped, tag = 'scoped memory for tpu_custom_call.1']
    #allocation5 [shape = 's32[1]{0}', space=sflag, size = 0x4, scoped, tag = 'scoped memory for tpu_custom_call.1']
    #allocation6 [shape = 'u8[131072]{0}', space=vmem, size = 0x20000, scoped, tag = 'input window, operand 1, single buffered']
    #allocation7 [shape = 's32[1]{0}', space=sflag, size = 0x4, scoped, tag = 'scoped memory for tpu_custom_call.1']
    #allocation8 [shape = 'u8[32768]{0}', space=vmem, size = 0x8000, scoped, tag = 'output window, operand 0, single buffered']
    %8 = vsyncpa [#allocation4], 0
    %9 = vsyncpa [#allocation7], 0
    %10 = vsyncpa [#allocation5], 0
    // Predicated region
    $region2: #{tpu_custom_call.1} parent=1 // pred_check
      _
    $region3: #{tpu_custom_call.1} parent=1 // pred_check_branch
      %12 = sbr.rel (0) target = $region5
    $region4: #{tpu_custom_call.1} parent=1 // pred_region
      %s14 = ssub.s32 512, 512
      %15 = vsyncadd [#allocation4], %s14
      %s16 = sshll.u32 [#allocation3], 4
      %s17 = int_to_ptr.vmem [resolvable:$true] %s16
      %22 = dma.hbm_to_vmem [thread:$0]  %s0, 512, %s17, [#allocation4], 128, 128, 8
    $region5: #{tpu_custom_call.1} parent=1 // pred_fallthru
      _
    // Predicated region
    $region6: #{tpu_custom_call.1} parent=1 // pred_check
      _
    $region7: #{tpu_custom_call.1} parent=1 // pred_check_branch
      %24 = sbr.rel (0) target = $region9
    $region8: #{tpu_custom_call.1} parent=1 // pred_region
      %s26 = ssub.s32 4096, 4096
      %27 = vsyncadd [#allocation7], %s26
      %s28 = sshll.u32 [#allocation6], 4
      %s29 = int_to_ptr.vmem [resolvable:$true] %s28
      %34 = dma.hbm_to_vmem [thread:$0]  %s1, 4096, %s29, [#allocation7], 256, 256, 16
    $region9: #{tpu_custom_call.1} parent=1 // pred_fallthru
      _
    // Predicated region
    $region10: #{tpu_custom_call.1} parent=1 // pred_check
      _
    $region11: #{tpu_custom_call.1} parent=1 // pred_check_branch
      %36 = sbr.rel (0) target = $region13
    $region12: #{tpu_custom_call.1} parent=1 // pred_region
      _
    $region13: #{tpu_custom_call.1} parent=1 // pred_fallthru
      _
    // Predicated region
    $region14: #{tpu_custom_call.1} parent=1 // pred_check
      _
    $region15: #{tpu_custom_call.1} parent=1 // pred_check_branch
      %38 = sbr.rel (0) target = $region17
    $region16: #{tpu_custom_call.1} parent=1 // pred_region
      %39 = dma.done [#allocation4], 512
    $region17: #{tpu_custom_call.1} parent=1 // pred_fallthru
      _
    // Predicated region
    $region18: #{tpu_custom_call.1} parent=1 // pred_check
      _
    $region19: #{tpu_custom_call.1} parent=1 // pred_check_branch
      %41 = sbr.rel (0) target = $region21
    $region20: #{tpu_custom_call.1} parent=1 // pred_region
      %42 = dma.done [#allocation7], 4096
    $region21: #{tpu_custom_call.1} parent=1 // pred_fallthru
      _
    %p43 = scmp.eq.s32.totalorder 0, 0
    // Predicated region
    $region22: #{tpu_custom_call.1} parent=1 // pred_check
      %p44 = pneg %p43
    $region23: #{tpu_custom_call.1} parent=1 // pred_check_branch
      %46 = sbr.rel (%p44) target = $region25
    $region24: #{tpu_custom_call.1} parent=1 // pred_region
      %47 = vst [vmem:[#allocation2] sm:$0xff] 0.0
      %48 = vst [vmem:[#allocation2 + $0x8] sm:$0xff] 0.0
      %49 = vst [vmem:[#allocation2 + $0x10] sm:$0xff] 0.0
      %50 = vst [vmem:[#allocation2 + $0x18] sm:$0xff] 0.0
      %51 = vst [vmem:[#allocation2 + $0x20] sm:$0xff] 0.0
      %52 = vst [vmem:[#allocation2 + $0x28] sm:$0xff] 0.0
      %53 = vst [vmem:[#allocation2 + $0x30] sm:$0xff] 0.0
      %54 = vst [vmem:[#allocation2 + $0x38] sm:$0xff] 0.0
    $region25: #{tpu_custom_call.1} parent=1 // pred_fallthru
      _
    %v55 = vld [vmem:[#allocation2] sm:$0xff]
    %v56 = vld [vmem:[#allocation2 + $0x8] sm:$0xff]
    %v57 = vld [vmem:[#allocation2 + $0x10] sm:$0xff]
    %v58 = vld [vmem:[#allocation2 + $0x18] sm:$0xff]
    %v59 = vld [vmem:[#allocation2 + $0x20] sm:$0xff]
    %v60 = vld [vmem:[#allocation2 + $0x28] sm:$0xff]
    %v61 = vld [vmem:[#allocation2 + $0x30] sm:$0xff]
    %v62 = vld [vmem:[#allocation2 + $0x38] sm:$0xff]
    %v63 = vld [vmem:[#allocation3] sm:$0xff]
    %v64 = vld [vmem:[#allocation3 + $0x8] sm:$0xff]
    %v65 = vld [vmem:[#allocation3 + $0x10] sm:$0xff]
    %v66 = vld [vmem:[#allocation3 + $0x18] sm:$0xff]
    %v67 = vld [vmem:[#allocation6] sm:$0xff]
    %v68 = vld [vmem:[#allocation6 + $0x8] sm:$0xff]
    %v69 = vld [vmem:[#allocation6 + $0x10] sm:$0xff]
    %v70 = vld [vmem:[#allocation6 + $0x18] sm:$0xff]
    %v71 = vld [vmem:[#allocation6 + $0x20] sm:$0xff]
    %v72 = vld [vmem:[#allocation6 + $0x28] sm:$0xff]
    %v73 = vld [vmem:[#allocation6 + $0x30] sm:$0xff]
    %v74 = vld [vmem:[#allocation6 + $0x38] sm:$0xff]
    %v75 = vld [vmem:[#allocation6 + $0x40] sm:$0xff]
    %v76 = vld [vmem:[#allocation6 + $0x48] sm:$0xff]
    %v77 = vld [vmem:[#allocation6 + $0x50] sm:$0xff]
    %v78 = vld [vmem:[#allocation6 + $0x58] sm:$0xff]
    %v79 = vld [vmem:[#allocation6 + $0x60] sm:$0xff]
    %v80 = vld [vmem:[#allocation6 + $0x68] sm:$0xff]
    %v81 = vld [vmem:[#allocation6 + $0x70] sm:$0xff]
    %v82 = vld [vmem:[#allocation6 + $0x78] sm:$0xff]
    %v83 = vld [vmem:[#allocation6 + $0x80] sm:$0xff]
    %v84 = vld [vmem:[#allocation6 + $0x88] sm:$0xff]
    %v85 = vld [vmem:[#allocation6 + $0x90] sm:$0xff]
    %v86 = vld [vmem:[#allocation6 + $0x98] sm:$0xff]
    %v87 = vld [vmem:[#allocation6 + $0xa0] sm:$0xff]
    %v88 = vld [vmem:[#allocation6 + $0xa8] sm:$0xff]
    %v89 = vld [vmem:[#allocation6 + $0xb0] sm:$0xff]
    %v90 = vld [vmem:[#allocation6 + $0xb8] sm:$0xff]
    %v91 = vld [vmem:[#allocation6 + $0xc0] sm:$0xff]
    %v92 = vld [vmem:[#allocation6 + $0xc8] sm:$0xff]
    %v93 = vld [vmem:[#allocation6 + $0xd0] sm:$0xff]
    %v94 = vld [vmem:[#allocation6 + $0xd8] sm:$0xff]
    %v95 = vld [vmem:[#allocation6 + $0xe0] sm:$0xff]
    %v96 = vld [vmem:[#allocation6 + $0xe8] sm:$0xff]
    %v97 = vld [vmem:[#allocation6 + $0xf0] sm:$0xff]
    %v98 = vld [vmem:[#allocation6 + $0xf8] sm:$0xff]
    %99 = vmatprep.subr.mxu0 %v68
    %100 = vmatpush1.msra.mxu0 %v67
    %101 = vmatprep.subr.mxu0 %v70
    %102 = vmatpush1.msra.mxu0 %v69
    %103 = vmatprep.subr.mxu0 %v72
    %104 = vmatpush1.msra.mxu0 %v71
    %105 = vmatprep.subr.mxu0 %v74
    %106 = vmatpush1.msra.mxu0 %v73
    %107 = vmatprep.subr.mxu0 %v76
    %108 = vmatpush1.msra.mxu0 %v75
    %109 = vmatprep.subr.mxu0 %v78
    %110 = vmatpush1.msra.mxu0 %v77
    %111 = vmatprep.subr.mxu0 %v80
    %112 = vmatpush1.msra.mxu0 %v79
    %113 = vmatprep.subr.mxu0 %v82
    %114 = vmatpush1.msra.mxu0 %v81
    %115 = vmatprep.subr.mxu0 %v84
    %116 = vmatpush1.msra.mxu0 %v83
    %117 = vmatprep.subr.mxu0 %v86
    %118 = vmatpush1.msra.mxu0 %v85
    %119 = vmatprep.subr.mxu0 %v88
    %120 = vmatpush1.msra.mxu0 %v87
    %121 = vmatprep.subr.mxu0 %v90
    %122 = vmatpush1.msra.mxu0 %v89
    %123 = vmatprep.subr.mxu0 %v92
    %124 = vmatpush1.msra.mxu0 %v91
    %125 = vmatprep.subr.mxu0 %v94
    %126 = vmatpush1.msra.mxu0 %v93
    %127 = vmatprep.subr.mxu0 %v96
    %128 = vmatpush1.msra.mxu0 %v95
    %129 = vmatprep.subr.mxu0 %v98
    %130 = vmatpush1.msra.mxu0 %v97
    %131 = vmatprep.subr.mxu0 0.0
    %132 = vmatpush1.msra.mxu0 0.0
    %133 = vmatprep.subr.mxu0 0.0
    %134 = vmatpush1.msra.mxu0 0.0
    %135 = vmatprep.subr.mxu0 0.0
    %136 = vmatpush1.msra.mxu0 0.0
    %137 = vmatprep.subr.mxu0 0.0
    %138 = vmatpush1.msra.mxu0 0.0
    %139 = vmatprep.subr.mxu0 0.0
    %140 = vmatpush1.msra.mxu0 0.0
    %141 = vmatprep.subr.mxu0 0.0
    %142 = vmatpush1.msra.mxu0 0.0
    %143 = vmatprep.subr.mxu0 0.0
    %144 = vmatpush1.msra.mxu0 0.0
    %145 = vmatprep.subr.mxu0 0.0
    %146 = vmatpush1.msra.mxu0 0.0
    %147 = vmatprep.subr.mxu0 0.0
    %148 = vmatpush1.msra.mxu0 0.0
    %149 = vmatprep.subr.mxu0 0.0
    %150 = vmatpush1.msra.mxu0 0.0
    %151 = vmatprep.subr.mxu0 0.0
    %152 = vmatpush1.msra.mxu0 0.0
    %153 = vmatprep.subr.mxu0 0.0
    %154 = vmatpush1.msra.mxu0 0.0
    %155 = vmatprep.subr.mxu0 0.0
    %156 = vmatpush1.msra.mxu0 0.0
    %157 = vmatprep.subr.mxu0 0.0
    %158 = vmatpush1.msra.mxu0 0.0
    %159 = vmatprep.subr.mxu0 0.0
    %160 = vmatpush1.msra.mxu0 0.0
    %161 = vmatprep.subr.mxu0 0.0
    %162 = vmatpush1.msra.mxu0 0.0
    %163 = vmatprep.mubr.f32.mxu0 0.0
    %164 = vmatmul.mubr.f32.gmra.mrb[0].mxu0 %v63
    %v165 = vpop.f32.mrb[0].mxu0
    %v166 = vadd.f32 0.0, %v165
    %v167 = vpop.f32.mrb[0].mxu0
    %v168 = vadd.f32 0.0, %v167
    %169 = vmatprep.mubr.f32.mxu0 0.0
    %170 = vmatmul.mubr.f32.gmra.mrb[0].mxu0 %v64
    %v171 = vpop.f32.mrb[0].mxu0
    %v172 = vadd.f32 0.0, %v171
    %v173 = vpop.f32.mrb[0].mxu0
    %v174 = vadd.f32 0.0, %v173
    %175 = vmatprep.mubr.f32.mxu0 0.0
    %176 = vmatmul.mubr.f32.gmra.mrb[0].mxu0 %v65
    %v177 = vpop.f32.mrb[0].mxu0
    %v178 = vadd.f32 0.0, %v177
    %v179 = vpop.f32.mrb[0].mxu0
    %v180 = vadd.f32 0.0, %v179
    %181 = vmatprep.mubr.f32.mxu0 0.0
    %182 = vmatmul.mubr.f32.gmra.mrb[0].mxu0 %v66
    %v183 = vpop.f32.mrb[0].mxu0
    %v184 = vadd.f32 0.0, %v183
    %v185 = vpop.f32.mrb[0].mxu0
    %v186 = vadd.f32 0.0, %v185
    %187 = vdwg.mxu0
    %v188 = vadd.f32 %v55, %v166
    %v189 = vadd.f32 %v56, %v168
    %v190 = vadd.f32 %v57, %v172
    %v191 = vadd.f32 %v58, %v174
    %v192 = vadd.f32 %v59, %v178
    %v193 = vadd.f32 %v60, %v180
    %v194 = vadd.f32 %v61, %v184
    %v195 = vadd.f32 %v62, %v186
    %196 = vst [vmem:[#allocation2] sm:$0xff] %v188
    %197 = vst [vmem:[#allocation2 + $0x8] sm:$0xff] %v189
    %198 = vst [vmem:[#allocation2 + $0x10] sm:$0xff] %v190
    %199 = vst [vmem:[#allocation2 + $0x18] sm:$0xff] %v191
    %200 = vst [vmem:[#allocation2 + $0x20] sm:$0xff] %v192
    %201 = vst [vmem:[#allocation2 + $0x28] sm:$0xff] %v193
    %202 = vst [vmem:[#allocation2 + $0x30] sm:$0xff] %v194
    %203 = vst [vmem:[#allocation2 + $0x38] sm:$0xff] %v195
    // Predicated region
    $region26: #{tpu_custom_call.1} parent=1 // pred_check
      %p204 = pneg %p43
    $region27: #{tpu_custom_call.1} parent=1 // pred_check_branch
      %206 = sbr.rel (%p204) target = $region29
    $region28: #{tpu_custom_call.1} parent=1 // pred_region
      %v207 = vld [vmem:[#allocation2] sm:$0xff]
      %v208 = vld [vmem:[#allocation2 + $0x8] sm:$0xff]
      %v209 = vld [vmem:[#allocation2 + $0x10] sm:$0xff]
      %v210 = vld [vmem:[#allocation2 + $0x18] sm:$0xff]
      %v211 = vld [vmem:[#allocation2 + $0x20] sm:$0xff]
      %v212 = vld [vmem:[#allocation2 + $0x28] sm:$0xff]
      %v213 = vld [vmem:[#allocation2 + $0x30] sm:$0xff]
      %v214 = vld [vmem:[#allocation2 + $0x38] sm:$0xff]
      %v215 = vld [vmem:[%s2] sm:$0x3]
      %v217 = vlaneseq
      %v218 = vshrl.u32 %v217, 7
      %v219 = vsub.s32 0, %v218
      %v220 = vrot.slane %v215, %v219
      %v221 = vlaneseq
      %v222 = vshrl.u32 %v221, 7
      %v223 = vsub.s32 1, %v222
      %v224 = vrot.slane %v215, %v223
      %v227 = vadd.f32 %v207, %v220
      %v228 = vadd.f32 %v208, %v224
      %v229 = vadd.f32 %v209, %v220
      %v230 = vadd.f32 %v210, %v224
      %v231 = vadd.f32 %v211, %v220
      %v232 = vadd.f32 %v212, %v224
      %v233 = vadd.f32 %v213, %v220
      %v234 = vadd.f32 %v214, %v224
      %235 = vst [vmem:[#allocation8] sm:$0xff] %v227
      %236 = vst [vmem:[#allocation8 + $0x8] sm:$0xff] %v228
      %237 = vst [vmem:[#allocation8 + $0x10] sm:$0xff] %v229
      %238 = vst [vmem:[#allocation8 + $0x18] sm:$0xff] %v230
      %239 = vst [vmem:[#allocation8 + $0x20] sm:$0xff] %v231
      %240 = vst [vmem:[#allocation8 + $0x28] sm:$0xff] %v232
      %241 = vst [vmem:[#allocation8 + $0x30] sm:$0xff] %v233
      %242 = vst [vmem:[#allocation8 + $0x38] sm:$0xff] %v234
    $region29: #{tpu_custom_call.1} parent=1 // pred_fallthru
      _
    // Predicated region
    $region30: #{tpu_custom_call.1} parent=1 // pred_check
      _
    $region31: #{tpu_custom_call.1} parent=1 // pred_check_branch
      %244 = sbr.rel (0) target = $region33
    $region32: #{tpu_custom_call.1} parent=1 // pred_region
      %s246 = ssub.s32 1024, 1024
      %247 = vsyncadd [#allocation5], %s246
      %s248 = sshll.u32 [#allocation8], 4
      %s249 = int_to_ptr.vmem [resolvable:$true] %s248
      %254 = dma.vmem_to_hbm [thread:$0]  %s249, 1024, %s3, [#allocation5], 256, 256, 16
    $region33: #{tpu_custom_call.1} parent=1 // pred_fallthru
      _
    // Predicated region
    $region34: #{tpu_custom_call.1} parent=1 // pred_check
      _
    $region35: #{tpu_custom_call.1} parent=1 // pred_check_branch
      %256 = sbr.rel (0) target = $region37
    $region36: #{tpu_custom_call.1} parent=1 // pred_region
      %257 = dma.done [#allocation5], 1024
    $region37: #{tpu_custom_call.1} parent=1 // pred_fallthru
      _
    %258 = vsyncpa [#allocation4], 1
    %259 = vsyncpa [#allocation7], 1
    %260 = vsyncpa [#allocation5], 1

</llo_original>
